<compile_context>
chip_gen: v5e
topology: v5e:2x2
jax: 0.10.0
libtpu: 0.0.40
codegen_flags: <defaults>
</compile_context>

<pallas_src>
import math

import jax
import jax.numpy as jnp
from jax import lax
from jax.experimental import pallas as pl
from jax.experimental.pallas import tpu as pltpu


_CHUNK = 512                              # rows per in-kernel sub-chunk
_TARGET_TILE_BYTES = 4 * 1024 * 1024      # folded-x bytes per grid step (x2 buffered)
_HIGHEST = jax.lax.Precision.HIGHEST


def _attend_chunk(x, w_bd, b_row, expand, S, F):
    """Attention forward for one (rows, S*F) chunk of folded x -> (rows, F)."""
    # e[r, s] = sum_f x[r, s, f] * w[f]   (MXU against the block-diagonal weight)
    e = jnp.dot(x, w_bd, preferred_element_type=jnp.float32, precision=_HIGHEST)
    e = jnp.tanh(e + b_row)                                   # (rows, S)
    p = jnp.exp(e)                                            # (rows, S)

    # Softmax-style normalization: EUP approx reciprocal + one Newton step.
    denom = jnp.sum(p, axis=1, keepdims=True) + 1e-10         # (rows, 1)
    inv = pl.reciprocal(denom, approx=True)
    inv = inv * (2.0 - denom * inv)                           # f32-accurate
    a = p * inv                                               # (rows, S)

    # Broadcast a[r, s] across its 32-lane feature group with a 0/1 MXU matmul
    # (no lane<->sublane relayout), weight x lane-dense, then segment-sum the
    # S lane groups with static lane slices + adds (exact f32).
    a_exp = jnp.dot(a, expand, preferred_element_type=jnp.float32,
                    precision=_HIGHEST)                       # (rows, S*F)
    y = a_exp * x                                             # lane-dense VPU
    out = y[:, 0:F]
    for s in range(1, S):
        out = out + y[:, s * F:(s + 1) * F]
    return out                                                # (rows, F)


def _make_kernel(S, F, chunk_rows, n_chunks):
    def kernel(x_ref, w_bd_ref, b_ref, expand_ref, out_ref):
        # Constant operands (fetched once; index_map is constant across grid).
        w_bd = w_bd_ref[...]          # (S*F, S)
        b_row = b_ref[...]            # (1, S)
        expand = expand_ref[...]      # (S, S*F)

        if n_chunks == 1:
            out_ref[...] = _attend_chunk(
                x_ref[...], w_bd, b_row, expand, S, F).astype(out_ref.dtype)
        else:
            # Sub-chunk loop: keeps elementwise / matmul temporaries bounded to
            # one 512-row chunk while the BlockSpec tile stays large for DMA.
            def body(c, carry):
                r0 = pl.multiple_of(c * chunk_rows, chunk_rows)
                xs = x_ref[pl.ds(r0, chunk_rows), :]
                out_ref[pl.ds(r0, chunk_rows), :] = _attend_chunk(
                    xs, w_bd, b_row, expand, S, F).astype(out_ref.dtype)
                return carry

            lax.fori_loop(0, n_chunks, body, 0)

    return kernel


def _choose_block_b(B, SF):
    """Batch-tile rows for the folded (B, S*F) layout.

    The folded layout has no lane padding, so one x buffer is exactly
    block_b * SF * 4 bytes (the BlockSpec pipeline double-buffers it; the
    lane-padded out tile and the ~few-hundred-KiB chunk temporaries fit well
    inside the VMEM limit).  When B is large the tile is a multiple of _CHUNK
    (no remainder handling in the sub-chunk loop) and capped at ~B/2 so the
    'parallel' grid has >= 2 steps for multi-TensorCore chips (v7x).
    """
    if B <= _CHUNK:
        return B
    rows = max(_CHUNK, (_TARGET_TILE_BYTES // (SF * 4)) // _CHUNK * _CHUNK)
    half = max(_CHUNK, (B // 2) // _CHUNK * _CHUNK)
    return min(rows, half)


def attention_forward(x, weight, bias, *, block_b=None):
    """x: (B, S, F) f32, weight: (F, 1) f32, bias: (S,) f32 -> (B, F) f32."""
    B, S, F = x.shape
    SF = S * F

    # Fold (S, F) into one lane-dense dim (free: contiguous row-major collapse).
    x2 = x.reshape(B, SF)

    # Constant operands, built once in the wrapper:
    #   w_bd[s*F + f, s]   = w[f]        (block-diagonal weight for e)
    #   expand[s, s*F + f] = 1           (0/1 group-broadcast matrix for a)
    eye_s = jnp.eye(S, dtype=x.dtype)
    w_bd = jnp.kron(eye_s, weight.astype(x.dtype))            # (S*F, S)
    expand = jnp.kron(eye_s, jnp.ones((1, F), x.dtype))       # (S, S*F)
    b_row = bias.astype(x.dtype).reshape(1, S)

    if block_b is None:
        block_b = _choose_block_b(B, SF)
    if block_b > _CHUNK and block_b % _CHUNK == 0:
        chunk_rows, n_chunks = _CHUNK, block_b // _CHUNK
    else:
        chunk_rows, n_chunks = block_b, 1
    grid = (pl.cdiv(B, block_b),)

    cost = pl.CostEstimate(
        flops=4 * B * S * SF + 4 * B * SF,        # two MXU matmuls + weighting/segsum
        transcendentals=2 * B * S + B,            # tanh + exp + reciprocal
        bytes_accessed=B * SF * 4 + B * F * 4 + (SF * S * 2 + S) * 4,
    )

    kernel = _make_kernel(S, F, chunk_rows, n_chunks)

    return pl.pallas_call(
        kernel,
        out_shape=jax.ShapeDtypeStruct((B, F), x.dtype),
        grid_spec=pltpu.PrefetchScalarGridSpec(
            num_scalar_prefetch=0,
            grid=grid,
            in_specs=[
                pl.BlockSpec((block_b, SF), lambda i: (i, 0)),   # folded x tile
                pl.BlockSpec((SF, S), lambda i: (0, 0)),         # block-diag weight
                pl.BlockSpec((1, S), lambda i: (0, 0)),          # bias row
                pl.BlockSpec((S, SF), lambda i: (0, 0)),         # 0/1 expansion
            ],
            out_specs=pl.BlockSpec((block_b, F), lambda i: (i, 0)),
        ),
        compiler_params=pltpu.CompilerParams(
            dimension_semantics=("parallel",),    # shard batch tiles across cores
            vmem_limit_bytes=40 * 1024 * 1024,    # ~2x headroom over worst-case use
        ),
        cost_estimate=cost,
    )(x2, w_bd, b_row, expand)


def attention_reference(x, weight, bias):
    """Pure-JAX reference mirroring the PyTorch forward (f32 throughout)."""
    e = jnp.einsum("bsf,fo->bs", x, weight,
                   precision=jax.lax.Precision.HIGHEST) + bias
    e = jnp.tanh(e)
    a = jnp.exp(e)
    a = a / (jnp.sum(a, axis=1, keepdims=True) + 1e-10)
    return jnp.sum(x * a[:, :, None], axis=1)


if __name__ == "__main__":
    # Small shapes consistent with the module: step_dim = 8, feature_dim = 32.
    batch, step_dim, feature_dim = 2, 8, 32

    key = jax.random.PRNGKey(0)
    kx, kw, kb = jax.random.split(key, 3)

    x = jax.random.normal(kx, (batch, step_dim, feature_dim), dtype=jnp.float32)

    # Param init mimicking nn.init.kaiming_uniform_ on an (F, 1) tensor:
    # fan_in = 1, gain = sqrt(2)  ->  bound = sqrt(6).
    bound = math.sqrt(6.0)
    weight = jax.random.uniform(kw, (feature_dim, 1), jnp.float32, -bound, bound)
    # Nonzero bias to exercise the bias path (module init is zeros; any value
    # is a valid learned parameter).
    bias = 0.1 * jax.random.normal(kb, (step_dim,), dtype=jnp.float32)

    out = jax.block_until_ready(attention_forward(x, weight, bias))
    ref = attention_reference(x, weight, bias)

    assert out.shape == (batch, feature_dim)
    assert jnp.allclose(out, ref, atol=2e-5, rtol=2e-5), "mismatch vs reference"

    print("KERNEL_OK")
</pallas_src>

<mosaic_0001>
module attributes {stable_mosaic.version = 11 : i64} {
  func.func @kernel(%arg0: i32, %arg1: memref<2x256xf32, #tpu.memory_space<vmem>>, %arg2: memref<256x8xf32, #tpu.memory_space<vmem>>, %arg3: memref<1x8xf32, #tpu.memory_space<vmem>>, %arg4: memref<8x256xf32, #tpu.memory_space<vmem>>, %arg5: memref<2x32xf32, #tpu.memory_space<vmem>>) attributes {dimension_semantics = [#tpu.dimension_semantics<parallel>], iteration_bounds = array<i64: 1>, scalar_prefetch = 0 : i64, scratch_operands = 0 : i64, tpu.core_type = #tpu.core_type<tc>, window_params = [{transform_indices = @transform_0, window_bounds = array<i64: 2, 256>}, {pipeline_mode = #tpu.pipeline_mode<synchronous>, transform_indices = @transform_1, window_bounds = array<i64: 256, 8>}, {pipeline_mode = #tpu.pipeline_mode<synchronous>, transform_indices = @transform_2, window_bounds = array<i64: 1, 8>}, {pipeline_mode = #tpu.pipeline_mode<synchronous>, transform_indices = @transform_3, window_bounds = array<i64: 8, 256>}, {transform_indices = @transform_4, window_bounds = array<i64: 2, 32>}]} {
    %c0 = arith.constant 0 : index
    %c0_0 = arith.constant 0 : index
    %0 = vector.load %arg2[%c0, %c0_0] : memref<256x8xf32, #tpu.memory_space<vmem>>, vector<256x8xf32>
    %c0_1 = arith.constant 0 : index
    %c0_2 = arith.constant 0 : index
    %1 = vector.load %arg3[%c0_1, %c0_2] : memref<1x8xf32, #tpu.memory_space<vmem>>, vector<1x8xf32>
    %c0_3 = arith.constant 0 : index
    %c0_4 = arith.constant 0 : index
    %2 = vector.load %arg4[%c0_3, %c0_4] : memref<8x256xf32, #tpu.memory_space<vmem>>, vector<8x256xf32>
    %c0_5 = arith.constant 0 : index
    %c0_6 = arith.constant 0 : index
    %3 = vector.load %arg1[%c0_5, %c0_6] : memref<2x256xf32, #tpu.memory_space<vmem>>, vector<2x256xf32>
    %cst = arith.constant dense<0.000000e+00> : vector<2x8xf32>
    %4 = tpu.matmul %3, %0, %cst {dimension_numbers = #tpu.dot_dimension_numbers<[1], [0], [0], [1], [0, 0, 1, 1], [], []>, precision = #tpu.contract_precision<fp32>} : vector<2x256xf32>, vector<256x8xf32>, vector<2x8xf32> -> vector<2x8xf32>
    %5 = vector.broadcast %1 : vector<1x8xf32> to vector<2x8xf32>
    %6 = arith.addf %4, %5 : vector<2x8xf32>
    %7 = math.tanh %6 : vector<2x8xf32>
    %8 = math.exp %7 : vector<2x8xf32>
    %cst_7 = arith.constant dense<0.000000e+00> : vector<2xf32>
    %9 = vector.multi_reduction <add>, %8, %cst_7 [1] : vector<2x8xf32> to vector<2xf32>
    %10 = vector.shape_cast %9 : vector<2xf32> to vector<2x1xf32>
    %cst_8 = arith.constant 1.000000e-10 : f32
    %11 = vector.broadcast %cst_8 : f32 to vector<2x1xf32>
    %12 = arith.addf %10, %11 : vector<2x1xf32>
    %13 = tpu.reciprocal %12 {approx = true} : vector<2x1xf32> -> vector<2x1xf32>
    %14 = arith.mulf %12, %13 : vector<2x1xf32>
    %cst_9 = arith.constant 2.000000e+00 : f32
    %15 = vector.broadcast %cst_9 : f32 to vector<2x1xf32>
    %16 = arith.subf %15, %14 : vector<2x1xf32>
    %17 = arith.mulf %13, %16 : vector<2x1xf32>
    %18 = vector.broadcast %17 : vector<2x1xf32> to vector<2x8xf32>
    %19 = arith.mulf %8, %18 : vector<2x8xf32>
    %cst_10 = arith.constant dense<0.000000e+00> : vector<2x256xf32>
    %20 = tpu.matmul %19, %2, %cst_10 {dimension_numbers = #tpu.dot_dimension_numbers<[1], [0], [0], [1], [0, 0, 1, 1], [], []>, precision = #tpu.contract_precision<fp32>} : vector<2x8xf32>, vector<8x256xf32>, vector<2x256xf32> -> vector<2x256xf32>
    %21 = arith.mulf %20, %3 : vector<2x256xf32>
    %22 = vector.extract_strided_slice %21 {offsets = [0, 0], sizes = [2, 32], strides = [1, 1]} : vector<2x256xf32> to vector<2x32xf32>
    %23 = vector.extract_strided_slice %21 {offsets = [0, 32], sizes = [2, 32], strides = [1, 1]} : vector<2x256xf32> to vector<2x32xf32>
    %24 = arith.addf %22, %23 : vector<2x32xf32>
    %25 = vector.extract_strided_slice %21 {offsets = [0, 64], sizes = [2, 32], strides = [1, 1]} : vector<2x256xf32> to vector<2x32xf32>
    %26 = arith.addf %24, %25 : vector<2x32xf32>
    %27 = vector.extract_strided_slice %21 {offsets = [0, 96], sizes = [2, 32], strides = [1, 1]} : vector<2x256xf32> to vector<2x32xf32>
    %28 = arith.addf %26, %27 : vector<2x32xf32>
    %29 = vector.extract_strided_slice %21 {offsets = [0, 128], sizes = [2, 32], strides = [1, 1]} : vector<2x256xf32> to vector<2x32xf32>
    %30 = arith.addf %28, %29 : vector<2x32xf32>
    %31 = vector.extract_strided_slice %21 {offsets = [0, 160], sizes = [2, 32], strides = [1, 1]} : vector<2x256xf32> to vector<2x32xf32>
    %32 = arith.addf %30, %31 : vector<2x32xf32>
    %33 = vector.extract_strided_slice %21 {offsets = [0, 192], sizes = [2, 32], strides = [1, 1]} : vector<2x256xf32> to vector<2x32xf32>
    %34 = arith.addf %32, %33 : vector<2x32xf32>
    %35 = vector.extract_strided_slice %21 {offsets = [0, 224], sizes = [2, 32], strides = [1, 1]} : vector<2x256xf32> to vector<2x32xf32>
    %36 = arith.addf %34, %35 : vector<2x32xf32>
    %c0_11 = arith.constant 0 : index
    %c0_12 = arith.constant 0 : index
    %37 = vector.load %arg5[%c0_11, %c0_12] : memref<2x32xf32, #tpu.memory_space<vmem>>, vector<2x32xf32>
    tpu.vector_store %arg5[%c0_11, %c0_12], %36 {strides = array<i32>} : memref<2x32xf32, #tpu.memory_space<vmem>>, vector<2x32xf32>,
    return
  }
  func.func @transform_0(%arg0: i32) -> (i32, i32) {
    %c0_i32 = arith.constant 0 : i32
    %c0_i32_0 = arith.constant 0 : i32
    return %arg0, %c0_i32 : i32, i32
  }
  func.func @transform_1(%arg0: i32) -> (i32, i32) {
    %c0_i32 = arith.constant 0 : i32
    %c0_i32_0 = arith.constant 0 : i32
    %c0_i32_1 = arith.constant 0 : i32
    return %c0_i32, %c0_i32_0 : i32, i32
  }
  func.func @transform_2(%arg0: i32) -> (i32, i32) {
    %c0_i32 = arith.constant 0 : i32
    %c0_i32_0 = arith.constant 0 : i32
    %c0_i32_1 = arith.constant 0 : i32
    return %c0_i32, %c0_i32_0 : i32, i32
  }
  func.func @transform_3(%arg0: i32) -> (i32, i32) {
    %c0_i32 = arith.constant 0 : i32
    %c0_i32_0 = arith.constant 0 : i32
    %c0_i32_1 = arith.constant 0 : i32
    return %c0_i32, %c0_i32_0 : i32, i32
  }
  func.func @transform_4(%arg0: i32) -> (i32, i32) {
    %c0_i32 = arith.constant 0 : i32
    %c0_i32_0 = arith.constant 0 : i32
    return %arg0, %c0_i32 : i32, i32
  }
}

</mosaic_0001>

<llo_original>
// kernel: tpu_custom_call.1
$region0: #{tpu_custom_call.1}
  #allocation0 [shape = 'u32[]', space=smem, size = 0x4, offset = 0x4, fixed_abs, tag = 'smem constant byte address 0x4 - core index']
  #allocation1 [shape = 'u32[72,128]{1,0:T(1,128)}', space=vmem, size = 0x9000, scoped, tag = 'internal scratch']
  %s0 = inlined_call_operand.vmem [shape: f32[2,256], index: 0, kind: input, shape index: {}]
  %s1 = inlined_call_operand.vmem [shape: f32[256,8], index: 1, kind: input, shape index: {}]
  %s2 = inlined_call_operand.vmem [shape: f32[1,8], index: 2, kind: input, shape index: {}]
  %s3 = inlined_call_operand.vmem [shape: f32[8,256], index: 3, kind: input, shape index: {}]
  %s4 = inlined_call_operand.hbm [shape: f32[2,32], index: 4, kind: output, shape index: {}]
  %s5 = sld [smem:[#allocation0]]
  $region26: #{tpu_custom_call.1} parent=0
    _
  %s7 = ssub.s32 1, %s5
  %s8 = scalar_select 0, %s7, %s5
  $region1: #{tpu_custom_call.1} parent=0
    #allocation2 [shape = 'u8[1024]{0}', space=vmem, size = 0x400, scoped, tag = 'output window, operand 0, single buffered']
    #allocation3 [shape = 's32[1]{0}', space=sflag, size = 0x4, scoped, tag = 'scoped memory for tpu_custom_call.1']
    %9 = vsyncpa [#allocation3], 0
    // Predicated region
    $region2: #{tpu_custom_call.1} parent=1 // pred_check
      _
    $region3: #{tpu_custom_call.1} parent=1 // pred_check_branch
      %11 = sbr.rel (0) target = $region5
    $region4: #{tpu_custom_call.1} parent=1 // pred_region
      _
    $region5: #{tpu_custom_call.1} parent=1 // pred_fallthru
      _
    // Predicated region
    $region6: #{tpu_custom_call.1} parent=1 // pred_check
      _
    $region7: #{tpu_custom_call.1} parent=1 // pred_check_branch
      %13 = sbr.rel (0) target = $region9
    $region8: #{tpu_custom_call.1} parent=1 // pred_region
      _
    $region9: #{tpu_custom_call.1} parent=1 // pred_fallthru
      _
    // Predicated region
    $region10: #{tpu_custom_call.1} parent=1 // pred_check
      _
    $region11: #{tpu_custom_call.1} parent=1 // pred_check_branch
      %15 = sbr.rel (0) target = $region13
    $region12: #{tpu_custom_call.1} parent=1 // pred_region
      _
    $region13: #{tpu_custom_call.1} parent=1 // pred_fallthru
      _
    // Predicated region
    $region14: #{tpu_custom_call.1} parent=1 // pred_check
      _
    $region15: #{tpu_custom_call.1} parent=1 // pred_check_branch
      %17 = sbr.rel (0) target = $region17
    $region16: #{tpu_custom_call.1} parent=1 // pred_region
      _
    $region17: #{tpu_custom_call.1} parent=1 // pred_fallthru
      _
    %v18 = vld [vmem:[%s1] sm:$0xff]
    %v19 = vld [vmem:[%s1 + $0x8] sm:$0xff]
    %v20 = vld [vmem:[%s1 + $0x10] sm:$0xff]
    %v21 = vld [vmem:[%s1 + $0x18] sm:$0xff]
    %v22 = vld [vmem:[%s1 + $0x20] sm:$0xff]
    %v23 = vld [vmem:[%s1 + $0x28] sm:$0xff]
    %v24 = vld [vmem:[%s1 + $0x30] sm:$0xff]
    %v25 = vld [vmem:[%s1 + $0x38] sm:$0xff]
    %v26 = vld [vmem:[%s1 + $0x40] sm:$0xff]
    %v27 = vld [vmem:[%s1 + $0x48] sm:$0xff]
    %v28 = vld [vmem:[%s1 + $0x50] sm:$0xff]
    %v29 = vld [vmem:[%s1 + $0x58] sm:$0xff]
    %v30 = vld [vmem:[%s1 + $0x60] sm:$0xff]
    %v31 = vld [vmem:[%s1 + $0x68] sm:$0xff]
    %v32 = vld [vmem:[%s1 + $0x70] sm:$0xff]
    %v33 = vld [vmem:[%s1 + $0x78] sm:$0xff]
    %v34 = vld [vmem:[%s1 + $0x80] sm:$0xff]
    %v35 = vld [vmem:[%s1 + $0x88] sm:$0xff]
    %v36 = vld [vmem:[%s1 + $0x90] sm:$0xff]
    %v37 = vld [vmem:[%s1 + $0x98] sm:$0xff]
    %v38 = vld [vmem:[%s1 + $0xa0] sm:$0xff]
    %v39 = vld [vmem:[%s1 + $0xa8] sm:$0xff]
    %v40 = vld [vmem:[%s1 + $0xb0] sm:$0xff]
    %v41 = vld [vmem:[%s1 + $0xb8] sm:$0xff]
    %v42 = vld [vmem:[%s1 + $0xc0] sm:$0xff]
    %v43 = vld [vmem:[%s1 + $0xc8] sm:$0xff]
    %v44 = vld [vmem:[%s1 + $0xd0] sm:$0xff]
    %v45 = vld [vmem:[%s1 + $0xd8] sm:$0xff]
    %v46 = vld [vmem:[%s1 + $0xe0] sm:$0xff]
    %v47 = vld [vmem:[%s1 + $0xe8] sm:$0xff]
    %v48 = vld [vmem:[%s1 + $0xf0] sm:$0xff]
    %v49 = vld [vmem:[%s1 + $0xf8] sm:$0xff]
    %v50 = vld [vmem:[%s2] sm:$0x1]
    %v51 = vld [vmem:[%s3] sm:$0xff]
    %v52 = vld [vmem:[%s3 + $0x8] sm:$0xff]
    %v53 = vld [vmem:[%s0] sm:$0xf]
    %v55 = vperm.slane %v50, 0
    %58 = vst [vmem:[#allocation1] ss:$4 sm:$0xff] %v53
    %v59 = vld.sshfl [vmem:[#allocation1] sm:$0xff pattern:$0x73625140]
    %v60 = vld.sshfl [vmem:[#allocation1 + $0x8] sm:$0xff pattern:$0x73625140]
    %v63 = vand.u32 %v33, 4294901760
    %64 = vmatpush.msra.mxu0 %v63
    %v65 = vand.u32 %v32, 4294901760
    %66 = vmatpush.msra.mxu0 %v65
    %v67 = vand.u32 %v31, 4294901760
    %68 = vmatpush.msra.mxu0 %v67
    %v69 = vand.u32 %v30, 4294901760
    %70 = vmatpush.msra.mxu0 %v69
    %v71 = vand.u32 %v29, 4294901760
    %72 = vmatpush.msra.mxu0 %v71
    %v73 = vand.u32 %v28, 4294901760
    %74 = vmatpush.msra.mxu0 %v73
    %v75 = vand.u32 %v27, 4294901760
    %76 = vmatpush.msra.mxu0 %v75
    %v77 = vand.u32 %v26, 4294901760
    %78 = vmatpush.msra.mxu0 %v77
    %v79 = vand.u32 %v25, 4294901760
    %80 = vmatpush.msra.mxu0 %v79
    %v81 = vand.u32 %v24, 4294901760
    %82 = vmatpush.msra.mxu0 %v81
    %v83 = vand.u32 %v23, 4294901760
    %84 = vmatpush.msra.mxu0 %v83
    %v85 = vand.u32 %v22, 4294901760
    %86 = vmatpush.msra.mxu0 %v85
    %v87 = vand.u32 %v21, 4294901760
    %88 = vmatpush.msra.mxu0 %v87
    %v89 = vand.u32 %v20, 4294901760
    %90 = vmatpush.msra.mxu0 %v89
    %v91 = vand.u32 %v19, 4294901760
    %92 = vmatpush.msra.mxu0 %v91
    %v93 = vand.u32 %v18, 4294901760
    %94 = vmatpush.msra.mxu0 %v93
    %v95 = vand.u32 %v59, 4294901760
    %v96 = vsub.f32 %v59, %v95
    %v97 = vand.u32 %v96, 4294901760
    %v98 = vsub.f32 %v96, %v97
    %v99 = vand.u32 %v98, 4294901760
    %100 = vmatmul.f32.gmra.mxu0 %v99
    %v101 = vpop.f32.mrf.mxu0
    %v102 = vadd.f32 %v55, %v101
    %103 = vdwg.mxu0
    %v104 = vand.u32 %v33, 4294901760
    %v105 = vsub.f32 %v33, %v104
    %v106 = vand.u32 %v105, 4294901760
    %v107 = vsub.f32 %v105, %v106
    %v108 = vand.u32 %v107, 4294901760
    %109 = vmatpush.msra.mxu0 %v108
    %v110 = vand.u32 %v32, 4294901760
    %v111 = vsub.f32 %v32, %v110
    %v112 = vand.u32 %v111, 4294901760
    %v113 = vsub.f32 %v111, %v112
    %v114 = vand.u32 %v113, 4294901760
    %115 = vmatpush.msra.mxu0 %v114
    %v116 = vand.u32 %v31, 4294901760
    %v117 = vsub.f32 %v31, %v116
    %v118 = vand.u32 %v117, 4294901760
    %v119 = vsub.f32 %v117, %v118
    %v120 = vand.u32 %v119, 4294901760
    %121 = vmatpush.msra.mxu0 %v120
    %v122 = vand.u32 %v30, 4294901760
    %v123 = vsub.f32 %v30, %v122
    %v124 = vand.u32 %v123, 4294901760
    %v125 = vsub.f32 %v123, %v124
    %v126 = vand.u32 %v125, 4294901760
    %127 = vmatpush.msra.mxu0 %v126
    %v128 = vand.u32 %v29, 4294901760
    %v129 = vsub.f32 %v29, %v128
    %v130 = vand.u32 %v129, 4294901760
    %v131 = vsub.f32 %v129, %v130
    %v132 = vand.u32 %v131, 4294901760
    %133 = vmatpush.msra.mxu0 %v132
    %v134 = vand.u32 %v28, 4294901760
    %v135 = vsub.f32 %v28, %v134
    %v136 = vand.u32 %v135, 4294901760
    %v137 = vsub.f32 %v135, %v136
    %v138 = vand.u32 %v137, 4294901760
    %139 = vmatpush.msra.mxu0 %v138
    %v140 = vand.u32 %v27, 4294901760
    %v141 = vsub.f32 %v27, %v140
    %v142 = vand.u32 %v141, 4294901760
    %v143 = vsub.f32 %v141, %v142
    %v144 = vand.u32 %v143, 4294901760
    %145 = vmatpush.msra.mxu0 %v144
    %v146 = vand.u32 %v26, 4294901760
    %v147 = vsub.f32 %v26, %v146
    %v148 = vand.u32 %v147, 4294901760
    %v149 = vsub.f32 %v147, %v148
    %v150 = vand.u32 %v149, 4294901760
    %151 = vmatpush.msra.mxu0 %v150
    %v152 = vand.u32 %v25, 4294901760
    %v153 = vsub.f32 %v25, %v152
    %v154 = vand.u32 %v153, 4294901760
    %v155 = vsub.f32 %v153, %v154
    %v156 = vand.u32 %v155, 4294901760
    %157 = vmatpush.msra.mxu0 %v156
    %v158 = vand.u32 %v24, 4294901760
    %v159 = vsub.f32 %v24, %v158
    %v160 = vand.u32 %v159, 4294901760
    %v161 = vsub.f32 %v159, %v160
    %v162 = vand.u32 %v161, 4294901760
    %163 = vmatpush.msra.mxu0 %v162
    %v164 = vand.u32 %v23, 4294901760
    %v165 = vsub.f32 %v23, %v164
    %v166 = vand.u32 %v165, 4294901760
    %v167 = vsub.f32 %v165, %v166
    %v168 = vand.u32 %v167, 4294901760
    %169 = vmatpush.msra.mxu0 %v168
    %v170 = vand.u32 %v22, 4294901760
    %v171 = vsub.f32 %v22, %v170
    %v172 = vand.u32 %v171, 4294901760
    %v173 = vsub.f32 %v171, %v172
    %v174 = vand.u32 %v173, 4294901760
    %175 = vmatpush.msra.mxu0 %v174
    %v176 = vand.u32 %v21, 4294901760
    %v177 = vsub.f32 %v21, %v176
    %v178 = vand.u32 %v177, 4294901760
    %v179 = vsub.f32 %v177, %v178
    %v180 = vand.u32 %v179, 4294901760
    %181 = vmatpush.msra.mxu0 %v180
    %v182 = vand.u32 %v20, 4294901760
    %v183 = vsub.f32 %v20, %v182
    %v184 = vand.u32 %v183, 4294901760
    %v185 = vsub.f32 %v183, %v184
    %v186 = vand.u32 %v185, 4294901760
    %187 = vmatpush.msra.mxu0 %v186
    %v188 = vand.u32 %v19, 4294901760
    %v189 = vsub.f32 %v19, %v188
    %v190 = vand.u32 %v189, 4294901760
    %v191 = vsub.f32 %v189, %v190
    %v192 = vand.u32 %v191, 4294901760
    %193 = vmatpush.msra.mxu0 %v192
    %v194 = vand.u32 %v18, 4294901760
    %v195 = vsub.f32 %v18, %v194
    %v196 = vand.u32 %v195, 4294901760
    %v197 = vsub.f32 %v195, %v196
    %v198 = vand.u32 %v197, 4294901760
    %199 = vmatpush.msra.mxu0 %v198
    %v200 = vand.u32 %v59, 4294901760
    %201 = vmatmul.f32.gmra.mxu0 %v200
    %v202 = vpop.f32.mrf.mxu0
    %v203 = vadd.f32 %v102, %v202
    %204 = vdwg.mxu0
    %v205 = vand.u32 %v33, 4294901760
    %v206 = vsub.f32 %v33, %v205
    %207 = vmatpush.msra.mxu0 %v206
    %v208 = vand.u32 %v32, 4294901760
    %v209 = vsub.f32 %v32, %v208
    %210 = vmatpush.msra.mxu0 %v209
    %v211 = vand.u32 %v31, 4294901760
    %v212 = vsub.f32 %v31, %v211
    %213 = vmatpush.msra.mxu0 %v212
    %v214 = vand.u32 %v30, 4294901760
    %v215 = vsub.f32 %v30, %v214
    %216 = vmatpush.msra.mxu0 %v215
    %v217 = vand.u32 %v29, 4294901760
    %v218 = vsub.f32 %v29, %v217
    %219 = vmatpush.msra.mxu0 %v218
    %v220 = vand.u32 %v28, 4294901760
    %v221 = vsub.f32 %v28, %v220
    %222 = vmatpush.msra.mxu0 %v221
    %v223 = vand.u32 %v27, 4294901760
    %v224 = vsub.f32 %v27, %v223
    %225 = vmatpush.msra.mxu0 %v224
    %v226 = vand.u32 %v26, 4294901760
    %v227 = vsub.f32 %v26, %v226
    %228 = vmatpush.msra.mxu0 %v227
    %v229 = vand.u32 %v25, 4294901760
    %v230 = vsub.f32 %v25, %v229
    %231 = vmatpush.msra.mxu0 %v230
    %v232 = vand.u32 %v24, 4294901760
    %v233 = vsub.f32 %v24, %v232
    %234 = vmatpush.msra.mxu0 %v233
    %v235 = vand.u32 %v23, 4294901760
    %v236 = vsub.f32 %v23, %v235
    %237 = vmatpush.msra.mxu0 %v236
    %v238 = vand.u32 %v22, 4294901760
    %v239 = vsub.f32 %v22, %v238
    %240 = vmatpush.msra.mxu0 %v239
    %v241 = vand.u32 %v21, 4294901760
    %v242 = vsub.f32 %v21, %v241
    %243 = vmatpush.msra.mxu0 %v242
    %v244 = vand.u32 %v20, 4294901760
    %v245 = vsub.f32 %v20, %v244
    %246 = vmatpush.msra.mxu0 %v245
    %v247 = vand.u32 %v19, 4294901760
    %v248 = vsub.f32 %v19, %v247
    %249 = vmatpush.msra.mxu0 %v248
    %v250 = vand.u32 %v18, 4294901760
    %v251 = vsub.f32 %v18, %v250
    %252 = vmatpush.msra.mxu0 %v251
    %v253 = vand.u32 %v59, 4294901760
    %v254 = vsub.f32 %v59, %v253
    %255 = vmatmul.f32.gmra.mxu0 %v254
    %v256 = vpop.f32.mrf.mxu0
    %v257 = vadd.f32 %v203, %v256
    %258 = vdwg.mxu0
    %v259 = vand.u32 %v33, 4294901760
    %260 = vmatpush.msra.mxu0 %v259
    %v261 = vand.u32 %v32, 4294901760
    %262 = vmatpush.msra.mxu0 %v261
    %v263 = vand.u32 %v31, 4294901760
    %264 = vmatpush.msra.mxu0 %v263
    %v265 = vand.u32 %v30, 4294901760
    %266 = vmatpush.msra.mxu0 %v265
    %v267 = vand.u32 %v29, 4294901760
    %268 = vmatpush.msra.mxu0 %v267
    %v269 = vand.u32 %v28, 4294901760
    %270 = vmatpush.msra.mxu0 %v269
    %v271 = vand.u32 %v27, 4294901760
    %272 = vmatpush.msra.mxu0 %v271
    %v273 = vand.u32 %v26, 4294901760
    %274 = vmatpush.msra.mxu0 %v273
    %v275 = vand.u32 %v25, 4294901760
    %276 = vmatpush.msra.mxu0 %v275
    %v277 = vand.u32 %v24, 4294901760
    %278 = vmatpush.msra.mxu0 %v277
    %v279 = vand.u32 %v23, 4294901760
    %280 = vmatpush.msra.mxu0 %v279
    %v281 = vand.u32 %v22, 4294901760
    %282 = vmatpush.msra.mxu0 %v281
    %v283 = vand.u32 %v21, 4294901760
    %284 = vmatpush.msra.mxu0 %v283
    %v285 = vand.u32 %v20, 4294901760
    %286 = vmatpush.msra.mxu0 %v285
    %v287 = vand.u32 %v19, 4294901760
    %288 = vmatpush.msra.mxu0 %v287
    %v289 = vand.u32 %v18, 4294901760
    %290 = vmatpush.msra.mxu0 %v289
    %v291 = vand.u32 %v59, 4294901760
    %v292 = vsub.f32 %v59, %v291
    %v293 = vand.u32 %v292, 4294901760
    %294 = vmatmul.f32.gmra.mxu0 %v293
    %v295 = vpop.f32.mrf.mxu0
    %v296 = vadd.f32 %v257, %v295
    %297 = vdwg.mxu0
    %v298 = vand.u32 %v33, 4294901760
    %v299 = vsub.f32 %v33, %v298
    %v300 = vand.u32 %v299, 4294901760
    %301 = vmatpush.msra.mxu0 %v300
    %v302 = vand.u32 %v32, 4294901760
    %v303 = vsub.f32 %v32, %v302
    %v304 = vand.u32 %v303, 4294901760
    %305 = vmatpush.msra.mxu0 %v304
    %v306 = vand.u32 %v31, 4294901760
    %v307 = vsub.f32 %v31, %v306
    %v308 = vand.u32 %v307, 4294901760
    %309 = vmatpush.msra.mxu0 %v308
    %v310 = vand.u32 %v30, 4294901760
    %v311 = vsub.f32 %v30, %v310
    %v312 = vand.u32 %v311, 4294901760
    %313 = vmatpush.msra.mxu0 %v312
    %v314 = vand.u32 %v29, 4294901760
    %v315 = vsub.f32 %v29, %v314
    %v316 = vand.u32 %v315, 4294901760
    %317 = vmatpush.msra.mxu0 %v316
    %v318 = vand.u32 %v28, 4294901760
    %v319 = vsub.f32 %v28, %v318
    %v320 = vand.u32 %v319, 4294901760
    %321 = vmatpush.msra.mxu0 %v320
    %v322 = vand.u32 %v27, 4294901760
    %v323 = vsub.f32 %v27, %v322
    %v324 = vand.u32 %v323, 4294901760
    %325 = vmatpush.msra.mxu0 %v324
    %v326 = vand.u32 %v26, 4294901760
    %v327 = vsub.f32 %v26, %v326
    %v328 = vand.u32 %v327, 4294901760
    %329 = vmatpush.msra.mxu0 %v328
    %v330 = vand.u32 %v25, 4294901760
    %v331 = vsub.f32 %v25, %v330
    %v332 = vand.u32 %v331, 4294901760
    %333 = vmatpush.msra.mxu0 %v332
    %v334 = vand.u32 %v24, 4294901760
    %v335 = vsub.f32 %v24, %v334
    %v336 = vand.u32 %v335, 4294901760
    %337 = vmatpush.msra.mxu0 %v336
    %v338 = vand.u32 %v23, 4294901760
    %v339 = vsub.f32 %v23, %v338
    %v340 = vand.u32 %v339, 4294901760
    %341 = vmatpush.msra.mxu0 %v340
    %v342 = vand.u32 %v22, 4294901760
    %v343 = vsub.f32 %v22, %v342
    %v344 = vand.u32 %v343, 4294901760
    %345 = vmatpush.msra.mxu0 %v344
    %v346 = vand.u32 %v21, 4294901760
    %v347 = vsub.f32 %v21, %v346
    %v348 = vand.u32 %v347, 4294901760
    %349 = vmatpush.msra.mxu0 %v348
    %v350 = vand.u32 %v20, 4294901760
    %v351 = vsub.f32 %v20, %v350
    %v352 = vand.u32 %v351, 4294901760
    %353 = vmatpush.msra.mxu0 %v352
    %v354 = vand.u32 %v19, 4294901760
    %v355 = vsub.f32 %v19, %v354
    %v356 = vand.u32 %v355, 4294901760
    %357 = vmatpush.msra.mxu0 %v356
    %v358 = vand.u32 %v18, 4294901760
    %v359 = vsub.f32 %v18, %v358
    %v360 = vand.u32 %v359, 4294901760
    %361 = vmatpush.msra.mxu0 %v360
    %v362 = vand.u32 %v59, 4294901760
    %363 = vmatmul.f32.gmra.mxu0 %v362
    %v364 = vpop.f32.mrf.mxu0
    %v365 = vadd.f32 %v296, %v364
    %366 = vdwg.mxu0
    %v367 = vand.u32 %v33, 4294901760
    %368 = vmatpush.msra.mxu0 %v367
    %v369 = vand.u32 %v32, 4294901760
    %370 = vmatpush.msra.mxu0 %v369
    %v371 = vand.u32 %v31, 4294901760
    %372 = vmatpush.msra.mxu0 %v371
    %v373 = vand.u32 %v30, 4294901760
    %374 = vmatpush.msra.mxu0 %v373
    %v375 = vand.u32 %v29, 4294901760
    %376 = vmatpush.msra.mxu0 %v375
    %v377 = vand.u32 %v28, 4294901760
    %378 = vmatpush.msra.mxu0 %v377
    %v379 = vand.u32 %v27, 4294901760
    %380 = vmatpush.msra.mxu0 %v379
    %v381 = vand.u32 %v26, 4294901760
    %382 = vmatpush.msra.mxu0 %v381
    %v383 = vand.u32 %v25, 4294901760
    %384 = vmatpush.msra.mxu0 %v383
    %v385 = vand.u32 %v24, 4294901760
    %386 = vmatpush.msra.mxu0 %v385
    %v387 = vand.u32 %v23, 4294901760
    %388 = vmatpush.msra.mxu0 %v387
    %v389 = vand.u32 %v22, 4294901760
    %390 = vmatpush.msra.mxu0 %v389
    %v391 = vand.u32 %v21, 4294901760
    %392 = vmatpush.msra.mxu0 %v391
    %v393 = vand.u32 %v20, 4294901760
    %394 = vmatpush.msra.mxu0 %v393
    %v395 = vand.u32 %v19, 4294901760
    %396 = vmatpush.msra.mxu0 %v395
    %v397 = vand.u32 %v18, 4294901760
    %398 = vmatpush.msra.mxu0 %v397
    %v399 = vand.u32 %v59, 4294901760
    %400 = vmatmul.f32.gmra.mxu0 %v399
    %v401 = vpop.f32.mrf.mxu0
    %v402 = vadd.f32 %v365, %v401
    %403 = vdwg.mxu0
    %v404 = vand.u32 %v49, 4294901760
    %405 = vmatpush.msra.mxu0 %v404
    %v406 = vand.u32 %v48, 4294901760
    %407 = vmatpush.msra.mxu0 %v406
    %v408 = vand.u32 %v47, 4294901760
    %409 = vmatpush.msra.mxu0 %v408
    %v410 = vand.u32 %v46, 4294901760
    %411 = vmatpush.msra.mxu0 %v410
    %v412 = vand.u32 %v45, 4294901760
    %413 = vmatpush.msra.mxu0 %v412
    %v414 = vand.u32 %v44, 4294901760
    %415 = vmatpush.msra.mxu0 %v414
    %v416 = vand.u32 %v43, 4294901760
    %417 = vmatpush.msra.mxu0 %v416
    %v418 = vand.u32 %v42, 4294901760
    %419 = vmatpush.msra.mxu0 %v418
    %v420 = vand.u32 %v41, 4294901760
    %421 = vmatpush.msra.mxu0 %v420
    %v422 = vand.u32 %v40, 4294901760
    %423 = vmatpush.msra.mxu0 %v422
    %v424 = vand.u32 %v39, 4294901760
    %425 = vmatpush.msra.mxu0 %v424
    %v426 = vand.u32 %v38, 4294901760
    %427 = vmatpush.msra.mxu0 %v426
    %v428 = vand.u32 %v37, 4294901760
    %429 = vmatpush.msra.mxu0 %v428
    %v430 = vand.u32 %v36, 4294901760
    %431 = vmatpush.msra.mxu0 %v430
    %v432 = vand.u32 %v35, 4294901760
    %433 = vmatpush.msra.mxu0 %v432
    %v434 = vand.u32 %v34, 4294901760
    %435 = vmatpush.msra.mxu0 %v434
    %v436 = vand.u32 %v60, 4294901760
    %v437 = vsub.f32 %v60, %v436
    %v438 = vand.u32 %v437, 4294901760
    %v439 = vsub.f32 %v437, %v438
    %v440 = vand.u32 %v439, 4294901760
    %441 = vmatmul.f32.gmra.mxu0 %v440
    %v442 = vpop.f32.mrf.mxu0
    %v443 = vadd.f32 %v402, %v442
    %444 = vdwg.mxu0
    %v445 = vand.u32 %v49, 4294901760
    %v446 = vsub.f32 %v49, %v445
    %v447 = vand.u32 %v446, 4294901760
    %v448 = vsub.f32 %v446, %v447
    %v449 = vand.u32 %v448, 4294901760
    %450 = vmatpush.msra.mxu0 %v449
    %v451 = vand.u32 %v48, 4294901760
    %v452 = vsub.f32 %v48, %v451
    %v453 = vand.u32 %v452, 4294901760
    %v454 = vsub.f32 %v452, %v453
    %v455 = vand.u32 %v454, 4294901760
    %456 = vmatpush.msra.mxu0 %v455
    %v457 = vand.u32 %v47, 4294901760
    %v458 = vsub.f32 %v47, %v457
    %v459 = vand.u32 %v458, 4294901760
    %v460 = vsub.f32 %v458, %v459
    %v461 = vand.u32 %v460, 4294901760
    %462 = vmatpush.msra.mxu0 %v461
    %v463 = vand.u32 %v46, 4294901760
    %v464 = vsub.f32 %v46, %v463
    %v465 = vand.u32 %v464, 4294901760
    %v466 = vsub.f32 %v464, %v465
    %v467 = vand.u32 %v466, 4294901760
    %468 = vmatpush.msra.mxu0 %v467
    %v469 = vand.u32 %v45, 4294901760
    %v470 = vsub.f32 %v45, %v469
    %v471 = vand.u32 %v470, 4294901760
    %v472 = vsub.f32 %v470, %v471
    %v473 = vand.u32 %v472, 4294901760
    %474 = vmatpush.msra.mxu0 %v473
    %v475 = vand.u32 %v44, 4294901760
    %v476 = vsub.f32 %v44, %v475
    %v477 = vand.u32 %v476, 4294901760
    %v478 = vsub.f32 %v476, %v477
    %v479 = vand.u32 %v478, 4294901760
    %480 = vmatpush.msra.mxu0 %v479
    %v481 = vand.u32 %v43, 4294901760
    %v482 = vsub.f32 %v43, %v481
    %v483 = vand.u32 %v482, 4294901760
    %v484 = vsub.f32 %v482, %v483
    %v485 = vand.u32 %v484, 4294901760
    %486 = vmatpush.msra.mxu0 %v485
    %v487 = vand.u32 %v42, 4294901760
    %v488 = vsub.f32 %v42, %v487
    %v489 = vand.u32 %v488, 4294901760
    %v490 = vsub.f32 %v488, %v489
    %v491 = vand.u32 %v490, 4294901760
    %492 = vmatpush.msra.mxu0 %v491
    %v493 = vand.u32 %v41, 4294901760
    %v494 = vsub.f32 %v41, %v493
    %v495 = vand.u32 %v494, 4294901760
    %v496 = vsub.f32 %v494, %v495
    %v497 = vand.u32 %v496, 4294901760
    %498 = vmatpush.msra.mxu0 %v497
    %v499 = vand.u32 %v40, 4294901760
    %v500 = vsub.f32 %v40, %v499
    %v501 = vand.u32 %v500, 4294901760
    %v502 = vsub.f32 %v500, %v501
    %v503 = vand.u32 %v502, 4294901760
    %504 = vmatpush.msra.mxu0 %v503
    %v505 = vand.u32 %v39, 4294901760
    %v506 = vsub.f32 %v39, %v505
    %v507 = vand.u32 %v506, 4294901760
    %v508 = vsub.f32 %v506, %v507
    %v509 = vand.u32 %v508, 4294901760
    %510 = vmatpush.msra.mxu0 %v509
    %v511 = vand.u32 %v38, 4294901760
    %v512 = vsub.f32 %v38, %v511
    %v513 = vand.u32 %v512, 4294901760
    %v514 = vsub.f32 %v512, %v513
    %v515 = vand.u32 %v514, 4294901760
    %516 = vmatpush.msra.mxu0 %v515
    %v517 = vand.u32 %v37, 4294901760
    %v518 = vsub.f32 %v37, %v517
    %v519 = vand.u32 %v518, 4294901760
    %v520 = vsub.f32 %v518, %v519
    %v521 = vand.u32 %v520, 4294901760
    %522 = vmatpush.msra.mxu0 %v521
    %v523 = vand.u32 %v36, 4294901760
    %v524 = vsub.f32 %v36, %v523
    %v525 = vand.u32 %v524, 4294901760
    %v526 = vsub.f32 %v524, %v525
    %v527 = vand.u32 %v526, 4294901760
    %528 = vmatpush.msra.mxu0 %v527
    %v529 = vand.u32 %v35, 4294901760
    %v530 = vsub.f32 %v35, %v529
    %v531 = vand.u32 %v530, 4294901760
    %v532 = vsub.f32 %v530, %v531
    %v533 = vand.u32 %v532, 4294901760
    %534 = vmatpush.msra.mxu0 %v533
    %v535 = vand.u32 %v34, 4294901760
    %v536 = vsub.f32 %v34, %v535
    %v537 = vand.u32 %v536, 4294901760
    %v538 = vsub.f32 %v536, %v537
    %v539 = vand.u32 %v538, 4294901760
    %540 = vmatpush.msra.mxu0 %v539
    %v541 = vand.u32 %v60, 4294901760
    %542 = vmatmul.f32.gmra.mxu0 %v541
    %v543 = vpop.f32.mrf.mxu0
    %v544 = vadd.f32 %v443, %v543
    %545 = vdwg.mxu0
    %v546 = vand.u32 %v49, 4294901760
    %v547 = vsub.f32 %v49, %v546
    %548 = vmatpush.msra.mxu0 %v547
    %v549 = vand.u32 %v48, 4294901760
    %v550 = vsub.f32 %v48, %v549
    %551 = vmatpush.msra.mxu0 %v550
    %v552 = vand.u32 %v47, 4294901760
    %v553 = vsub.f32 %v47, %v552
    %554 = vmatpush.msra.mxu0 %v553
    %v555 = vand.u32 %v46, 4294901760
    %v556 = vsub.f32 %v46, %v555
    %557 = vmatpush.msra.mxu0 %v556
    %v558 = vand.u32 %v45, 4294901760
    %v559 = vsub.f32 %v45, %v558
    %560 = vmatpush.msra.mxu0 %v559
    %v561 = vand.u32 %v44, 4294901760
    %v562 = vsub.f32 %v44, %v561
    %563 = vmatpush.msra.mxu0 %v562
    %v564 = vand.u32 %v43, 4294901760
    %v565 = vsub.f32 %v43, %v564
    %566 = vmatpush.msra.mxu0 %v565
    %v567 = vand.u32 %v42, 4294901760
    %v568 = vsub.f32 %v42, %v567
    %569 = vmatpush.msra.mxu0 %v568
    %v570 = vand.u32 %v41, 4294901760
    %v571 = vsub.f32 %v41, %v570
    %572 = vmatpush.msra.mxu0 %v571
    %v573 = vand.u32 %v40, 4294901760
    %v574 = vsub.f32 %v40, %v573
    %575 = vmatpush.msra.mxu0 %v574
    %v576 = vand.u32 %v39, 4294901760
    %v577 = vsub.f32 %v39, %v576
    %578 = vmatpush.msra.mxu0 %v577
    %v579 = vand.u32 %v38, 4294901760
    %v580 = vsub.f32 %v38, %v579
    %581 = vmatpush.msra.mxu0 %v580
    %v582 = vand.u32 %v37, 4294901760
    %v583 = vsub.f32 %v37, %v582
    %584 = vmatpush.msra.mxu0 %v583
    %v585 = vand.u32 %v36, 4294901760
    %v586 = vsub.f32 %v36, %v585
    %587 = vmatpush.msra.mxu0 %v586
    %v588 = vand.u32 %v35, 4294901760
    %v589 = vsub.f32 %v35, %v588
    %590 = vmatpush.msra.mxu0 %v589
    %v591 = vand.u32 %v34, 4294901760
    %v592 = vsub.f32 %v34, %v591
    %593 = vmatpush.msra.mxu0 %v592
    %v594 = vand.u32 %v60, 4294901760
    %v595 = vsub.f32 %v60, %v594
    %596 = vmatmul.f32.gmra.mxu0 %v595
    %v597 = vpop.f32.mrf.mxu0
    %v598 = vadd.f32 %v544, %v597
    %599 = vdwg.mxu0
    %v600 = vand.u32 %v49, 4294901760
    %601 = vmatpush.msra.mxu0 %v600
    %v602 = vand.u32 %v48, 4294901760
    %603 = vmatpush.msra.mxu0 %v602
    %v604 = vand.u32 %v47, 4294901760
    %605 = vmatpush.msra.mxu0 %v604
    %v606 = vand.u32 %v46, 4294901760
    %607 = vmatpush.msra.mxu0 %v606
    %v608 = vand.u32 %v45, 4294901760
    %609 = vmatpush.msra.mxu0 %v608
    %v610 = vand.u32 %v44, 4294901760
    %611 = vmatpush.msra.mxu0 %v610
    %v612 = vand.u32 %v43, 4294901760
    %613 = vmatpush.msra.mxu0 %v612
    %v614 = vand.u32 %v42, 4294901760
    %615 = vmatpush.msra.mxu0 %v614
    %v616 = vand.u32 %v41, 4294901760
    %617 = vmatpush.msra.mxu0 %v616
    %v618 = vand.u32 %v40, 4294901760
    %619 = vmatpush.msra.mxu0 %v618
    %v620 = vand.u32 %v39, 4294901760
    %621 = vmatpush.msra.mxu0 %v620
    %v622 = vand.u32 %v38, 4294901760
    %623 = vmatpush.msra.mxu0 %v622
    %v624 = vand.u32 %v37, 4294901760
    %625 = vmatpush.msra.mxu0 %v624
    %v626 = vand.u32 %v36, 4294901760
    %627 = vmatpush.msra.mxu0 %v626
    %v628 = vand.u32 %v35, 4294901760
    %629 = vmatpush.msra.mxu0 %v628
    %v630 = vand.u32 %v34, 4294901760
    %631 = vmatpush.msra.mxu0 %v630
    %v632 = vand.u32 %v60, 4294901760
    %v633 = vsub.f32 %v60, %v632
    %v634 = vand.u32 %v633, 4294901760
    %635 = vmatmul.f32.gmra.mxu0 %v634
    %v636 = vpop.f32.mrf.mxu0
    %v637 = vadd.f32 %v598, %v636
    %638 = vdwg.mxu0
    %v639 = vand.u32 %v49, 4294901760
    %v640 = vsub.f32 %v49, %v639
    %v641 = vand.u32 %v640, 4294901760
    %642 = vmatpush.msra.mxu0 %v641
    %v643 = vand.u32 %v48, 4294901760
    %v644 = vsub.f32 %v48, %v643
    %v645 = vand.u32 %v644, 4294901760
    %646 = vmatpush.msra.mxu0 %v645
    %v647 = vand.u32 %v47, 4294901760
    %v648 = vsub.f32 %v47, %v647
    %v649 = vand.u32 %v648, 4294901760
    %650 = vmatpush.msra.mxu0 %v649
    %v651 = vand.u32 %v46, 4294901760
    %v652 = vsub.f32 %v46, %v651
    %v653 = vand.u32 %v652, 4294901760
    %654 = vmatpush.msra.mxu0 %v653
    %v655 = vand.u32 %v45, 4294901760
    %v656 = vsub.f32 %v45, %v655
    %v657 = vand.u32 %v656, 4294901760
    %658 = vmatpush.msra.mxu0 %v657
    %v659 = vand.u32 %v44, 4294901760
    %v660 = vsub.f32 %v44, %v659
    %v661 = vand.u32 %v660, 4294901760
    %662 = vmatpush.msra.mxu0 %v661
    %v663 = vand.u32 %v43, 4294901760
    %v664 = vsub.f32 %v43, %v663
    %v665 = vand.u32 %v664, 4294901760
    %666 = vmatpush.msra.mxu0 %v665
    %v667 = vand.u32 %v42, 4294901760
    %v668 = vsub.f32 %v42, %v667
    %v669 = vand.u32 %v668, 4294901760
    %670 = vmatpush.msra.mxu0 %v669
    %v671 = vand.u32 %v41, 4294901760
    %v672 = vsub.f32 %v41, %v671
    %v673 = vand.u32 %v672, 4294901760
    %674 = vmatpush.msra.mxu0 %v673
    %v675 = vand.u32 %v40, 4294901760
    %v676 = vsub.f32 %v40, %v675
    %v677 = vand.u32 %v676, 4294901760
    %678 = vmatpush.msra.mxu0 %v677
    %v679 = vand.u32 %v39, 4294901760
    %v680 = vsub.f32 %v39, %v679
    %v681 = vand.u32 %v680, 4294901760
    %682 = vmatpush.msra.mxu0 %v681
    %v683 = vand.u32 %v38, 4294901760
    %v684 = vsub.f32 %v38, %v683
    %v685 = vand.u32 %v684, 4294901760
    %686 = vmatpush.msra.mxu0 %v685
    %v687 = vand.u32 %v37, 4294901760
    %v688 = vsub.f32 %v37, %v687
    %v689 = vand.u32 %v688, 4294901760
    %690 = vmatpush.msra.mxu0 %v689
    %v691 = vand.u32 %v36, 4294901760
    %v692 = vsub.f32 %v36, %v691
    %v693 = vand.u32 %v692, 4294901760
    %694 = vmatpush.msra.mxu0 %v693
    %v695 = vand.u32 %v35, 4294901760
    %v696 = vsub.f32 %v35, %v695
    %v697 = vand.u32 %v696, 4294901760
    %698 = vmatpush.msra.mxu0 %v697
    %v699 = vand.u32 %v34, 4294901760
    %v700 = vsub.f32 %v34, %v699
    %v701 = vand.u32 %v700, 4294901760
    %702 = vmatpush.msra.mxu0 %v701
    %v703 = vand.u32 %v60, 4294901760
    %704 = vmatmul.f32.gmra.mxu0 %v703
    %v705 = vpop.f32.mrf.mxu0
    %v706 = vadd.f32 %v637, %v705
    %707 = vdwg.mxu0
    %v708 = vand.u32 %v49, 4294901760
    %709 = vmatpush.msra.mxu0 %v708
    %v710 = vand.u32 %v48, 4294901760
    %711 = vmatpush.msra.mxu0 %v710
    %v712 = vand.u32 %v47, 4294901760
    %713 = vmatpush.msra.mxu0 %v712
    %v714 = vand.u32 %v46, 4294901760
    %715 = vmatpush.msra.mxu0 %v714
    %v716 = vand.u32 %v45, 4294901760
    %717 = vmatpush.msra.mxu0 %v716
    %v718 = vand.u32 %v44, 4294901760
    %719 = vmatpush.msra.mxu0 %v718
    %v720 = vand.u32 %v43, 4294901760
    %721 = vmatpush.msra.mxu0 %v720
    %v722 = vand.u32 %v42, 4294901760
    %723 = vmatpush.msra.mxu0 %v722
    %v724 = vand.u32 %v41, 4294901760
    %725 = vmatpush.msra.mxu0 %v724
    %v726 = vand.u32 %v40, 4294901760
    %727 = vmatpush.msra.mxu0 %v726
    %v728 = vand.u32 %v39, 4294901760
    %729 = vmatpush.msra.mxu0 %v728
    %v730 = vand.u32 %v38, 4294901760
    %731 = vmatpush.msra.mxu0 %v730
    %v732 = vand.u32 %v37, 4294901760
    %733 = vmatpush.msra.mxu0 %v732
    %v734 = vand.u32 %v36, 4294901760
    %735 = vmatpush.msra.mxu0 %v734
    %v736 = vand.u32 %v35, 4294901760
    %737 = vmatpush.msra.mxu0 %v736
    %v738 = vand.u32 %v34, 4294901760
    %739 = vmatpush.msra.mxu0 %v738
    %v740 = vand.u32 %v60, 4294901760
    %741 = vmatmul.f32.gmra.mxu0 %v740
    %v742 = vpop.f32.mrf.mxu0
    %v743 = vadd.f32 %v706, %v742
    %744 = vdwg.mxu0
    %v745 = vtanh.pop %v743
    %v746 = vmul.f32 %v745, 1.442695
    %v747 = vpow.pop %v746
    %vm748 = vcmask 58368
    %v749 = vsel %vm748, %v747, 0.0
    %750 = vadd.xlane.f32.xlu0 %v749
    %v751 = vpop.xlane.xlu0 %750
    %v752 = vadd.f32 %v751, 1e-10
    %v753 = vrcp.pop %v752
    %v754 = vmul.f32 %v752, %v753
    %v755 = vsub.f32 2.0, %v754
    %v756 = vmul.f32 %v753, %v755
    %v757 = vmul.f32 %v747, %v756
    %vm758 = vcmask 64512
    %v760 = vsel %vm758, %v757, 0
    %762 = vmatpush.msra.mxu0 0.0
    %763 = vmatpush.msra.mxu0 0.0
    %764 = vmatpush.msra.mxu0 0.0
    %765 = vmatpush.msra.mxu0 0.0
    %766 = vmatpush.msra.mxu0 0.0
    %767 = vmatpush.msra.mxu0 0.0
    %768 = vmatpush.msra.mxu0 0.0
    %769 = vmatpush.msra.mxu0 0.0
    %770 = vmatpush.msra.mxu0 0.0
    %771 = vmatpush.msra.mxu0 0.0
    %772 = vmatpush.msra.mxu0 0.0
    %773 = vmatpush.msra.mxu0 0.0
    %774 = vmatpush.msra.mxu0 0.0
    %775 = vmatpush.msra.mxu0 0.0
    %776 = vmatpush.msra.mxu0 0.0
    %v777 = vand.u32 %v51, 4294901760
    %778 = vmatpush.msra.mxu0 %v777
    %v779 = vand.u32 %v760, 4294901760
    %v780 = vsub.f32 %v760, %v779
    %v781 = vand.u32 %v780, 4294901760
    %v782 = vsub.f32 %v780, %v781
    %v783 = vand.u32 %v782, 4294901760
    %784 = vmatmul.f32.gmra.mxu0 %v783
    %v785 = vpop.f32.mrf.mxu0
    %v786 = vadd.f32 0.0, %v785
    %787 = vdwg.mxu0
    %788 = vmatpush.msra.mxu0 0.0
    %789 = vmatpush.msra.mxu0 0.0
    %790 = vmatpush.msra.mxu0 0.0
    %791 = vmatpush.msra.mxu0 0.0
    %792 = vmatpush.msra.mxu0 0.0
    %793 = vmatpush.msra.mxu0 0.0
    %794 = vmatpush.msra.mxu0 0.0
    %795 = vmatpush.msra.mxu0 0.0
    %796 = vmatpush.msra.mxu0 0.0
    %797 = vmatpush.msra.mxu0 0.0
    %798 = vmatpush.msra.mxu0 0.0
    %799 = vmatpush.msra.mxu0 0.0
    %800 = vmatpush.msra.mxu0 0.0
    %801 = vmatpush.msra.mxu0 0.0
    %802 = vmatpush.msra.mxu0 0.0
    %v803 = vand.u32 %v51, 4294901760
    %v804 = vsub.f32 %v51, %v803
    %v805 = vand.u32 %v804, 4294901760
    %v806 = vsub.f32 %v804, %v805
    %v807 = vand.u32 %v806, 4294901760
    %808 = vmatpush.msra.mxu0 %v807
    %v809 = vand.u32 %v760, 4294901760
    %810 = vmatmul.f32.gmra.mxu0 %v809
    %v811 = vpop.f32.mrf.mxu0
    %v812 = vadd.f32 %v786, %v811
    %813 = vdwg.mxu0
    %814 = vmatpush.msra.mxu0 0.0
    %815 = vmatpush.msra.mxu0 0.0
    %816 = vmatpush.msra.mxu0 0.0
    %817 = vmatpush.msra.mxu0 0.0
    %818 = vmatpush.msra.mxu0 0.0
    %819 = vmatpush.msra.mxu0 0.0
    %820 = vmatpush.msra.mxu0 0.0
    %821 = vmatpush.msra.mxu0 0.0
    %822 = vmatpush.msra.mxu0 0.0
    %823 = vmatpush.msra.mxu0 0.0
    %824 = vmatpush.msra.mxu0 0.0
    %825 = vmatpush.msra.mxu0 0.0
    %826 = vmatpush.msra.mxu0 0.0
    %827 = vmatpush.msra.mxu0 0.0
    %828 = vmatpush.msra.mxu0 0.0
    %v829 = vand.u32 %v51, 4294901760
    %v830 = vsub.f32 %v51, %v829
    %831 = vmatpush.msra.mxu0 %v830
    %v832 = vand.u32 %v760, 4294901760
    %v833 = vsub.f32 %v760, %v832
    %834 = vmatmul.f32.gmra.mxu0 %v833
    %v835 = vpop.f32.mrf.mxu0
    %v836 = vadd.f32 %v812, %v835
    %837 = vdwg.mxu0
    %838 = vmatpush.msra.mxu0 0.0
    %839 = vmatpush.msra.mxu0 0.0
    %840 = vmatpush.msra.mxu0 0.0
    %841 = vmatpush.msra.mxu0 0.0
    %842 = vmatpush.msra.mxu0 0.0
    %843 = vmatpush.msra.mxu0 0.0
    %844 = vmatpush.msra.mxu0 0.0
    %845 = vmatpush.msra.mxu0 0.0
    %846 = vmatpush.msra.mxu0 0.0
    %847 = vmatpush.msra.mxu0 0.0
    %848 = vmatpush.msra.mxu0 0.0
    %849 = vmatpush.msra.mxu0 0.0
    %850 = vmatpush.msra.mxu0 0.0
    %851 = vmatpush.msra.mxu0 0.0
    %852 = vmatpush.msra.mxu0 0.0
    %v853 = vand.u32 %v51, 4294901760
    %854 = vmatpush.msra.mxu0 %v853
    %v855 = vand.u32 %v760, 4294901760
    %v856 = vsub.f32 %v760, %v855
    %v857 = vand.u32 %v856, 4294901760
    %858 = vmatmul.f32.gmra.mxu0 %v857
    %v859 = vpop.f32.mrf.mxu0
    %v860 = vadd.f32 %v836, %v859
    %861 = vdwg.mxu0
    %862 = vmatpush.msra.mxu0 0.0
    %863 = vmatpush.msra.mxu0 0.0
    %864 = vmatpush.msra.mxu0 0.0
    %865 = vmatpush.msra.mxu0 0.0
    %866 = vmatpush.msra.mxu0 0.0
    %867 = vmatpush.msra.mxu0 0.0
    %868 = vmatpush.msra.mxu0 0.0
    %869 = vmatpush.msra.mxu0 0.0
    %870 = vmatpush.msra.mxu0 0.0
    %871 = vmatpush.msra.mxu0 0.0
    %872 = vmatpush.msra.mxu0 0.0
    %873 = vmatpush.msra.mxu0 0.0
    %874 = vmatpush.msra.mxu0 0.0
    %875 = vmatpush.msra.mxu0 0.0
    %876 = vmatpush.msra.mxu0 0.0
    %v877 = vand.u32 %v51, 4294901760
    %v878 = vsub.f32 %v51, %v877
    %v879 = vand.u32 %v878, 4294901760
    %880 = vmatpush.msra.mxu0 %v879
    %v881 = vand.u32 %v760, 4294901760
    %882 = vmatmul.f32.gmra.mxu0 %v881
    %v883 = vpop.f32.mrf.mxu0
    %v884 = vadd.f32 %v860, %v883
    %885 = vdwg.mxu0
    %886 = vmatpush.msra.mxu0 0.0
    %887 = vmatpush.msra.mxu0 0.0
    %888 = vmatpush.msra.mxu0 0.0
    %889 = vmatpush.msra.mxu0 0.0
    %890 = vmatpush.msra.mxu0 0.0
    %891 = vmatpush.msra.mxu0 0.0
    %892 = vmatpush.msra.mxu0 0.0
    %893 = vmatpush.msra.mxu0 0.0
    %894 = vmatpush.msra.mxu0 0.0
    %895 = vmatpush.msra.mxu0 0.0
    %896 = vmatpush.msra.mxu0 0.0
    %897 = vmatpush.msra.mxu0 0.0
    %898 = vmatpush.msra.mxu0 0.0
    %899 = vmatpush.msra.mxu0 0.0
    %900 = vmatpush.msra.mxu0 0.0
    %v901 = vand.u32 %v51, 4294901760
    %902 = vmatpush.msra.mxu0 %v901
    %v903 = vand.u32 %v760, 4294901760
    %904 = vmatmul.f32.gmra.mxu0 %v903
    %v905 = vpop.f32.mrf.mxu0
    %v906 = vadd.f32 %v884, %v905
    %907 = vdwg.mxu0
    %908 = vmatpush.msra.mxu0 0.0
    %909 = vmatpush.msra.mxu0 0.0
    %910 = vmatpush.msra.mxu0 0.0
    %911 = vmatpush.msra.mxu0 0.0
    %912 = vmatpush.msra.mxu0 0.0
    %913 = vmatpush.msra.mxu0 0.0
    %914 = vmatpush.msra.mxu0 0.0
    %915 = vmatpush.msra.mxu0 0.0
    %916 = vmatpush.msra.mxu0 0.0
    %917 = vmatpush.msra.mxu0 0.0
    %918 = vmatpush.msra.mxu0 0.0
    %919 = vmatpush.msra.mxu0 0.0
    %920 = vmatpush.msra.mxu0 0.0
    %921 = vmatpush.msra.mxu0 0.0
    %922 = vmatpush.msra.mxu0 0.0
    %v923 = vand.u32 %v52, 4294901760
    %924 = vmatpush.msra.mxu0 %v923
    %v925 = vand.u32 %v760, 4294901760
    %v926 = vsub.f32 %v760, %v925
    %v927 = vand.u32 %v926, 4294901760
    %v928 = vsub.f32 %v926, %v927
    %v929 = vand.u32 %v928, 4294901760
    %930 = vmatmul.f32.gmra.mxu0 %v929
    %v931 = vpop.f32.mrf.mxu0
    %v932 = vadd.f32 0.0, %v931
    %933 = vdwg.mxu0
    %934 = vmatpush.msra.mxu0 0.0
    %935 = vmatpush.msra.mxu0 0.0
    %936 = vmatpush.msra.mxu0 0.0
    %937 = vmatpush.msra.mxu0 0.0
    %938 = vmatpush.msra.mxu0 0.0
    %939 = vmatpush.msra.mxu0 0.0
    %940 = vmatpush.msra.mxu0 0.0
    %941 = vmatpush.msra.mxu0 0.0
    %942 = vmatpush.msra.mxu0 0.0
    %943 = vmatpush.msra.mxu0 0.0
    %944 = vmatpush.msra.mxu0 0.0
    %945 = vmatpush.msra.mxu0 0.0
    %946 = vmatpush.msra.mxu0 0.0
    %947 = vmatpush.msra.mxu0 0.0
    %948 = vmatpush.msra.mxu0 0.0
    %v949 = vand.u32 %v52, 4294901760
    %v950 = vsub.f32 %v52, %v949
    %v951 = vand.u32 %v950, 4294901760
    %v952 = vsub.f32 %v950, %v951
    %v953 = vand.u32 %v952, 4294901760
    %954 = vmatpush.msra.mxu0 %v953
    %v955 = vand.u32 %v760, 4294901760
    %956 = vmatmul.f32.gmra.mxu0 %v955
    %v957 = vpop.f32.mrf.mxu0
    %v958 = vadd.f32 %v932, %v957
    %959 = vdwg.mxu0
    %960 = vmatpush.msra.mxu0 0.0
    %961 = vmatpush.msra.mxu0 0.0
    %962 = vmatpush.msra.mxu0 0.0
    %963 = vmatpush.msra.mxu0 0.0
    %964 = vmatpush.msra.mxu0 0.0
    %965 = vmatpush.msra.mxu0 0.0
    %966 = vmatpush.msra.mxu0 0.0
    %967 = vmatpush.msra.mxu0 0.0
    %968 = vmatpush.msra.mxu0 0.0
    %969 = vmatpush.msra.mxu0 0.0
    %970 = vmatpush.msra.mxu0 0.0
    %971 = vmatpush.msra.mxu0 0.0
    %972 = vmatpush.msra.mxu0 0.0
    %973 = vmatpush.msra.mxu0 0.0
    %974 = vmatpush.msra.mxu0 0.0
    %v975 = vand.u32 %v52, 4294901760
    %v976 = vsub.f32 %v52, %v975
    %977 = vmatpush.msra.mxu0 %v976
    %v978 = vand.u32 %v760, 4294901760
    %v979 = vsub.f32 %v760, %v978
    %980 = vmatmul.f32.gmra.mxu0 %v979
    %v981 = vpop.f32.mrf.mxu0
    %v982 = vadd.f32 %v958, %v981
    %983 = vdwg.mxu0
    %984 = vmatpush.msra.mxu0 0.0
    %985 = vmatpush.msra.mxu0 0.0
    %986 = vmatpush.msra.mxu0 0.0
    %987 = vmatpush.msra.mxu0 0.0
    %988 = vmatpush.msra.mxu0 0.0
    %989 = vmatpush.msra.mxu0 0.0
    %990 = vmatpush.msra.mxu0 0.0
    %991 = vmatpush.msra.mxu0 0.0
    %992 = vmatpush.msra.mxu0 0.0
    %993 = vmatpush.msra.mxu0 0.0
    %994 = vmatpush.msra.mxu0 0.0
    %995 = vmatpush.msra.mxu0 0.0
    %996 = vmatpush.msra.mxu0 0.0
    %997 = vmatpush.msra.mxu0 0.0
    %998 = vmatpush.msra.mxu0 0.0
    %v999 = vand.u32 %v52, 4294901760
    %1000 = vmatpush.msra.mxu0 %v999
    %v1001 = vand.u32 %v760, 4294901760
    %v1002 = vsub.f32 %v760, %v1001
    %v1003 = vand.u32 %v1002, 4294901760
    %1004 = vmatmul.f32.gmra.mxu0 %v1003
    %v1005 = vpop.f32.mrf.mxu0
    %v1006 = vadd.f32 %v982, %v1005
    %1007 = vdwg.mxu0
    %1008 = vmatpush.msra.mxu0 0.0
    %1009 = vmatpush.msra.mxu0 0.0
    %1010 = vmatpush.msra.mxu0 0.0
    %1011 = vmatpush.msra.mxu0 0.0
    %1012 = vmatpush.msra.mxu0 0.0
    %1013 = vmatpush.msra.mxu0 0.0
    %1014 = vmatpush.msra.mxu0 0.0
    %1015 = vmatpush.msra.mxu0 0.0
    %1016 = vmatpush.msra.mxu0 0.0
    %1017 = vmatpush.msra.mxu0 0.0
    %1018 = vmatpush.msra.mxu0 0.0
    %1019 = vmatpush.msra.mxu0 0.0
    %1020 = vmatpush.msra.mxu0 0.0
    %1021 = vmatpush.msra.mxu0 0.0
    %1022 = vmatpush.msra.mxu0 0.0
    %v1023 = vand.u32 %v52, 4294901760
    %v1024 = vsub.f32 %v52, %v1023
    %v1025 = vand.u32 %v1024, 4294901760
    %1026 = vmatpush.msra.mxu0 %v1025
    %v1027 = vand.u32 %v760, 4294901760
    %1028 = vmatmul.f32.gmra.mxu0 %v1027
    %v1029 = vpop.f32.mrf.mxu0
    %v1030 = vadd.f32 %v1006, %v1029
    %1031 = vdwg.mxu0
    %1032 = vmatpush.msra.mxu0 0.0
    %1033 = vmatpush.msra.mxu0 0.0
    %1034 = vmatpush.msra.mxu0 0.0
    %1035 = vmatpush.msra.mxu0 0.0
    %1036 = vmatpush.msra.mxu0 0.0
    %1037 = vmatpush.msra.mxu0 0.0
    %1038 = vmatpush.msra.mxu0 0.0
    %1039 = vmatpush.msra.mxu0 0.0
    %1040 = vmatpush.msra.mxu0 0.0
    %1041 = vmatpush.msra.mxu0 0.0
    %1042 = vmatpush.msra.mxu0 0.0
    %1043 = vmatpush.msra.mxu0 0.0
    %1044 = vmatpush.msra.mxu0 0.0
    %1045 = vmatpush.msra.mxu0 0.0
    %1046 = vmatpush.msra.mxu0 0.0
    %v1047 = vand.u32 %v52, 4294901760
    %1048 = vmatpush.msra.mxu0 %v1047
    %v1049 = vand.u32 %v760, 4294901760
    %1050 = vmatmul.f32.gmra.mxu0 %v1049
    %v1051 = vpop.f32.mrf.mxu0
    %v1052 = vadd.f32 %v1030, %v1051
    %1053 = vdwg.mxu0
    %1054 = vst [vmem:[#allocation1] ss:$4 sm:$0xff] %v53
    %v1055 = vld.sshfl [vmem:[#allocation1] sm:$0xff pattern:$0x73625140]
    %v1056 = vld.sshfl [vmem:[#allocation1 + $0x8] sm:$0xff pattern:$0x73625140]
    %v1059 = vmul.f32 %v906, %v1055
    %v1060 = vmul.f32 %v1052, %v1056
    %1062 = vrot.lane.b32.xlu0 %v1059, 96
    %v1063 = vpop.permute.xlu0 %1062
    %v1065 = vadd.f32 %v1059, %v1063
    %1066 = vrot.lane.b32.xlu0 %v1059, 64
    %v1067 = vpop.permute.xlu0 %1066
    %v1069 = vadd.f32 %v1065, %v1067
    %1070 = vrot.lane.b32.xlu0 %v1059, 32
    %v1071 = vpop.permute.xlu0 %1070
    %v1073 = vadd.f32 %v1069, %v1071
    %v1074 = vadd.f32 %v1073, %v1060
    %1076 = vrot.lane.b32.xlu0 %v1060, 96
    %v1077 = vpop.permute.xlu0 %1076
    %v1079 = vadd.f32 %v1074, %v1077
    %1080 = vrot.lane.b32.xlu0 %v1060, 64
    %v1081 = vpop.permute.xlu0 %1080
    %v1083 = vadd.f32 %v1079, %v1081
    %1084 = vrot.lane.b32.xlu0 %v1060, 32
    %v1085 = vpop.permute.xlu0 %1084
    %v1087 = vadd.f32 %v1083, %v1085
    %vm1088 = vcmask 254976
    %1089 = vst.msk [vmem:[#allocation2] sm:$0x3] %vm1088, %v1087
    // Predicated region
    $region18: #{tpu_custom_call.1} parent=1 // pred_check
      _
    $region19: #{tpu_custom_call.1} parent=1 // pred_check_branch
      %1091 = sbr.rel (0) target = $region21
    $region20: #{tpu_custom_call.1} parent=1 // pred_region
      %1093 = vsyncadd [#allocation3], 0
      %s1095 = sshll.u32 [#allocation2], 4
      %s1096 = int_to_ptr.vmem [resolvable:$true] %s1095
      %s1097 = sshll.u32 %s4, 4
      %s1098 = int_to_ptr.hbm [resolvable:$true] %s1097
      %1100 = dma.vmem_to_hbm [thread:$0]  %s1096, 32, %s1098, [#allocation3]
    $region21: #{tpu_custom_call.1} parent=1 // pred_fallthru
      _
    // Predicated region
    $region22: #{tpu_custom_call.1} parent=1 // pred_check
      _
    $region23: #{tpu_custom_call.1} parent=1 // pred_check_branch
      %1102 = sbr.rel (0) target = $region25
    $region24: #{tpu_custom_call.1} parent=1 // pred_region
      %1104 = dma.done [#allocation3], 32
    $region25: #{tpu_custom_call.1} parent=1 // pred_fallthru
      _
    %1105 = vsyncpa [#allocation3], 1

</llo_original>
